<compile_context>
chip_gen: v7x
topology: tpu7x:2x2x1
jax: 0.10.0
libtpu: 0.0.40
codegen_flags: <defaults>
</compile_context>

<pallas_src>
import functools

import jax
import jax.numpy as jnp
from jax.experimental import pallas as pl
from jax.experimental.pallas import tpu as pltpu


# --------------------------- VMEM budget (per gen) ----------------------------
def _round_up(x: int, m: int) -> int:
    return -(-x // m) * m


def _vmem_limit_bytes() -> int:
    """Generation-aware VMEM budget: ~half of physical VMEM, clamped so it is
    safe on v7x (64 MiB physical) while letting v5e/v6e (128 MiB) use bigger
    tiles."""
    default = 32 * 1024 * 1024
    try:
        cap = int(getattr(pltpu.get_tpu_info(), "vmem_capacity_bytes",
                          2 * default))
    except Exception:  # non-TPU tracing / interpret mode
        cap = 2 * default
    return int(min(64 * 1024 * 1024, max(default, cap // 2)))


# ----------------------------- tile selection ---------------------------------
def _choose_tile(hw: int, c: int, itemsize: int, vmem_limit: int,
                 max_tile=None):
    """Pick (tile, hw_pad): lane tile (multiple of 128) and padded lane extent.

    Byte formula counts padded sublanes (C rounded to 8 for f32 / 16 for bf16;
    the (1, TILE) int32 target and f32 psum blocks cost 8 sublanes each), all
    double-buffered.  Budget is ~2/3 of the vmem limit, lane cap 32768.
    """
    budget = (2 * vmem_limit) // 3
    sub = 16 if itemsize == 2 else 8
    c_pad = _round_up(c, sub)
    per_lane = 2 * c_pad * itemsize + 2 * 8 * 4 + 2 * 8 * 4
    cap = budget // per_lane
    cap = max(128, min(32768, cap - cap % 128))
    if max_tile is not None:
        cap = max(128, min(cap, max_tile - max_tile % 128))

    hw128 = _round_up(hw, 128)
    if hw128 <= cap:
        return hw128, hw128

    # Prefer a large tile that divides hw128 exactly (no pad copy of logits).
    best_div = 0
    for t in range(cap, 127, -128):
        if hw128 % t == 0:
            best_div = t
            break
    if hw % 128 == 0 and best_div >= max(2048, cap // 4):
        return best_div, hw128

    # Otherwise pad HW: minimize grid steps first, then total padded lanes.
    best_t, best_key = 128, None
    for t in range(128, cap + 1, 128):
        total = _round_up(hw, t)
        key = (total // t, total)
        if best_key is None or key < best_key:
            best_key, best_t = key, t
    return best_t, _round_up(hw, best_t)


# ------------------------------- kernel ----------------------------------------
def _ce_kernel(logits_ref, tgt_ref, psum_ref, *, hw, tile, nbp, masked):
    """Per-pixel cross entropy for one (C, TILE) logits block, accumulated
    lane-wise into a resident per-image (1, TILE) partial-sum block."""
    i = pl.program_id(2)

    @pl.when(i == 0)
    def _():
        psum_ref[...] = jnp.zeros_like(psum_ref)

    x = logits_ref[...].astype(jnp.float32)            # (C, TILE) in f32
    tgt = tgt_ref[...]                                  # (1, TILE) int32

    # cross entropy = logsumexp_c(x) - x[target]
    #               = log(sum_c exp(x - m)) - (x[target] - m)
    m = jnp.max(x, axis=0, keepdims=True)               # (1, TILE)
    xm = x - m                                           # reused twice
    s = jnp.sum(jnp.exp(xm), axis=0, keepdims=True)
    cls = jax.lax.broadcasted_iota(jnp.int32, x.shape, 0)
    sel = jnp.sum(jnp.where(cls == tgt, xm, 0.0), axis=0, keepdims=True)
    loss = jnp.log(s) - sel                              # (1, TILE)

    if masked:
        base = (pl.program_id(1) * nbp + i) * tile
        lane = jax.lax.broadcasted_iota(jnp.int32, (1, tile), 1)
        loss = jnp.where(base + lane < hw, loss, 0.0)

    psum_ref[...] += loss                                # lane-dense accumulate


# ------------------------------- wrapper ----------------------------------------
@functools.partial(jax.jit, static_argnames=("max_tile",))
def cross_entropy_loss(logits, targets, *, max_tile=None):
    """logits: (N, C, H, W) float (f32/bf16/f16, streamed in native dtype);
    targets: (N, H, W) (or (N,1,H,W)) int.  Returns mean cross entropy."""
    N, C, H, W = logits.shape
    if targets.ndim == 4:
        targets = targets[:, 0]
    HW = H * W

    itemsize = jnp.dtype(logits.dtype).itemsize
    vmem_limit = _vmem_limit_bytes()
    tile, hw_pad = _choose_tile(HW, C, itemsize, vmem_limit, max_tile)
    nb = hw_pad // tile

    # Free, contiguous reshapes — no HBM transpose, no dtype upcast.
    x3 = logits.reshape(N, C, HW)
    t3 = targets.reshape(N, 1, HW).astype(jnp.int32)
    if hw_pad != HW:
        # One extra HBM pass over logits; only taken when HW has no large
        # 128-multiple divisor.  Padded lanes are masked out in-kernel.
        x3 = jnp.pad(x3, ((0, 0), (0, 0), (0, hw_pad - HW)))
        t3 = jnp.pad(t3, ((0, 0), (0, 0), (0, hw_pad - HW)))

    # v7x has 2 TensorCores: when N == 1, split lane blocks 2-way on a
    # 'parallel' axis so both cores get work (no-op on v5e/v6e).
    P = 2 if (N < 2 and nb >= 2 and nb % 2 == 0) else 1
    nbp = nb // P

    kernel = functools.partial(_ce_kernel, hw=HW, tile=tile, nbp=nbp,
                               masked=(hw_pad != HW))

    # NOTE: if profiling ever shows exposed DMA at small tiles, add
    # pipeline_mode=pl.Buffered(3) to the logits BlockSpec below.
    psum = pl.pallas_call(
        kernel,
        out_shape=jax.ShapeDtypeStruct((N, P, 1, tile), jnp.float32),
        grid=(N, P, nbp),
        in_specs=[
            pl.BlockSpec((None, C, tile), lambda n, p, i: (n, 0, p * nbp + i)),
            pl.BlockSpec((None, 1, tile), lambda n, p, i: (n, 0, p * nbp + i)),
        ],
        out_specs=pl.BlockSpec((None, None, 1, tile),
                               lambda n, p, i: (n, p, 0, 0)),
        compiler_params=pltpu.CompilerParams(
            dimension_semantics=("parallel", "parallel", "arbitrary"),
            vmem_limit_bytes=vmem_limit,
        ),
    )(x3, t3)

    # Tiny (N * P * tile elements) final reduction + mean: plain-JAX glue.
    return jnp.sum(psum) / jnp.float32(N * HW)


# --------------------------- pure-JAX reference ---------------------------------
def cross_entropy_ref(logits, targets):
    logp = jax.nn.log_softmax(logits.astype(jnp.float32), axis=1)
    t = targets.astype(jnp.int32)
    ce = -jnp.take_along_axis(logp, t[:, None], axis=1)[:, 0]
    return ce.mean()


if __name__ == "__main__":
    key = jax.random.PRNGKey(0)
    k1, k2, k3 = jax.random.split(key, 3)

    # 1) f32 logits, 128-multiple spatial extent (no-padding fast path).
    N, C, H, W = 2, 4, 16, 16
    logits = jax.random.normal(k1, (N, C, H, W), dtype=jnp.float32)
    targets = jax.random.randint(k2, (N, H, W), 0, C, dtype=jnp.int32)
    out = jax.block_until_ready(cross_entropy_loss(logits, targets))
    ref = cross_entropy_ref(logits, targets)
    assert jnp.allclose(out, ref, rtol=1e-5, atol=1e-6), (out, ref)

    # 2) bf16 logits streamed natively (half the HBM bytes; math stays f32).
    out_bf16 = jax.block_until_ready(
        cross_entropy_loss(logits.astype(jnp.bfloat16), targets))
    ref_bf16 = cross_entropy_ref(
        logits.astype(jnp.bfloat16).astype(jnp.float32), targets)
    assert jnp.allclose(out_bf16, ref_bf16, rtol=1e-4, atol=1e-5), (out_bf16, ref_bf16)

    # 3) HW not a multiple of 128 -> pad + in-kernel lane masking.
    N2, C2, H2, W2 = 2, 5, 15, 15
    logits2 = jax.random.normal(k3, (N2, C2, H2, W2), dtype=jnp.float32)
    targets2 = jax.random.randint(k2, (N2, H2, W2), 0, C2, dtype=jnp.int32)
    out2 = jax.block_until_ready(cross_entropy_loss(logits2, targets2))
    ref2 = cross_entropy_ref(logits2, targets2)
    assert jnp.allclose(out2, ref2, rtol=1e-5, atol=1e-6), (out2, ref2)

    # 4) N=1 with multiple lane blocks -> exercises the 2-way 'parallel' split
    #    used for v7x's two TensorCores (max_tile forces a small tile).
    out3 = jax.block_until_ready(
        cross_entropy_loss(logits[:1], targets[:1], max_tile=128))
    ref3 = cross_entropy_ref(logits[:1], targets[:1])
    assert jnp.allclose(out3, ref3, rtol=1e-5, atol=1e-6), (out3, ref3)

    print("KERNEL_OK")
</pallas_src>

<mosaic_0001>
module attributes {stable_mosaic.version = 11 : i64} {
  func.func @_ce_kernel(%arg0: i32, %arg1: i32, %arg2: i32, %arg3: memref<1x4x256xf32, #tpu.memory_space<vmem>>, %arg4: memref<1x1x256xi32, #tpu.memory_space<vmem>>, %arg5: memref<1x1x1x256xf32, #tpu.memory_space<vmem>>) attributes {dimension_semantics = [#tpu.dimension_semantics<parallel>, #tpu.dimension_semantics<parallel>, #tpu.dimension_semantics<arbitrary>], iteration_bounds = array<i64: 2, 1, 1>, scalar_prefetch = 0 : i64, scratch_operands = 0 : i64, tpu.core_type = #tpu.core_type<tc>, window_params = [{transform_indices = @transform_0, window_bounds = array<i64: 1, 4, 256>}, {transform_indices = @transform_1, window_bounds = array<i64: 1, 1, 256>}, {transform_indices = @transform_2, window_bounds = array<i64: 1, 1, 1, 256>}]} {
    %c0_i32 = arith.constant 0 : i32
    %0 = arith.cmpi eq, %arg2, %c0_i32 : i32
    %1 = arith.extui %0 : i1 to i32
    %c0_i32_0 = arith.constant 0 : i32
    %2 = arith.cmpi ne, %1, %c0_i32_0 : i32
    scf.if %2 {
      %cst_17 = arith.constant 0.000000e+00 : f32
      %29 = vector.broadcast %cst_17 : f32 to vector<1x256xf32>
      %c0_18 = arith.constant 0 : index
      %c0_19 = arith.constant 0 : index
      %c0_20 = arith.constant 0 : index
      %c0_21 = arith.constant 0 : index
      %30 = vector.load %arg5[%c0_18, %c0_19, %c0_20, %c0_21] : memref<1x1x1x256xf32, #tpu.memory_space<vmem>>, vector<1x1x1x256xf32>
      %31 = vector.shape_cast %30 : vector<1x1x1x256xf32> to vector<1x256xf32>
      %32 = vector.shape_cast %29 : vector<1x256xf32> to vector<1x1x1x256xf32>
      tpu.vector_store %arg5[%c0_18, %c0_19, %c0_20, %c0_21], %32 {strides = array<i32>} : memref<1x1x1x256xf32, #tpu.memory_space<vmem>>, vector<1x1x1x256xf32>,
    } else {
    }
    %c0 = arith.constant 0 : index
    %c0_1 = arith.constant 0 : index
    %c0_2 = arith.constant 0 : index
    %3 = vector.load %arg3[%c0, %c0_1, %c0_2] : memref<1x4x256xf32, #tpu.memory_space<vmem>>, vector<1x4x256xf32>
    %4 = vector.shape_cast %3 : vector<1x4x256xf32> to vector<4x256xf32>
    %c0_3 = arith.constant 0 : index
    %c0_4 = arith.constant 0 : index
    %c0_5 = arith.constant 0 : index
    %5 = vector.load %arg4[%c0_3, %c0_4, %c0_5] : memref<1x1x256xi32, #tpu.memory_space<vmem>>, vector<1x1x256xi32>
    %6 = vector.shape_cast %5 : vector<1x1x256xi32> to vector<1x256xi32>
    %cst = arith.constant dense<0xFF800000> : vector<256xf32>
    %7 = vector.multi_reduction <maximumf>, %4, %cst [0] : vector<4x256xf32> to vector<256xf32>
    %8 = vector.shape_cast %7 : vector<256xf32> to vector<1x256xf32>
    %9 = vector.broadcast %8 : vector<1x256xf32> to vector<4x256xf32>
    %10 = arith.subf %4, %9 : vector<4x256xf32>
    %11 = math.exp %10 : vector<4x256xf32>
    %cst_6 = arith.constant dense<0.000000e+00> : vector<256xf32>
    %12 = vector.multi_reduction <add>, %11, %cst_6 [0] : vector<4x256xf32> to vector<256xf32>
    %13 = vector.shape_cast %12 : vector<256xf32> to vector<1x256xf32>
    %14 = tpu.iota {dimensions = array<i32: 0>} : vector<4x256xi32>
    %15 = vector.broadcast %6 : vector<1x256xi32> to vector<4x256xi32>
    %16 = arith.cmpi eq, %14, %15 : vector<4x256xi32>
    %cst_7 = arith.constant 0.000000e+00 : f32
    %17 = vector.broadcast %cst_7 : f32 to vector<4x256xf32>
    %18 = arith.select %16, %10, %17 : vector<4x256xi1>, vector<4x256xf32>
    %cst_8 = arith.constant dense<0.000000e+00> : vector<256xf32>
    %19 = vector.multi_reduction <add>, %18, %cst_8 [0] : vector<4x256xf32> to vector<256xf32>
    %20 = vector.shape_cast %19 : vector<256xf32> to vector<1x256xf32>
    %21 = math.log %13 : vector<1x256xf32>
    %22 = arith.subf %21, %20 : vector<1x256xf32>
    %c0_9 = arith.constant 0 : index
    %c0_10 = arith.constant 0 : index
    %c0_11 = arith.constant 0 : index
    %c0_12 = arith.constant 0 : index
    %23 = vector.load %arg5[%c0_9, %c0_10, %c0_11, %c0_12] : memref<1x1x1x256xf32, #tpu.memory_space<vmem>>, vector<1x1x1x256xf32>
    %24 = vector.shape_cast %23 : vector<1x1x1x256xf32> to vector<1x256xf32>
    %25 = arith.addf %24, %22 : vector<1x256xf32>
    %c0_13 = arith.constant 0 : index
    %c0_14 = arith.constant 0 : index
    %c0_15 = arith.constant 0 : index
    %c0_16 = arith.constant 0 : index
    %26 = vector.load %arg5[%c0_13, %c0_14, %c0_15, %c0_16] : memref<1x1x1x256xf32, #tpu.memory_space<vmem>>, vector<1x1x1x256xf32>
    %27 = vector.shape_cast %26 : vector<1x1x1x256xf32> to vector<1x256xf32>
    %28 = vector.shape_cast %25 : vector<1x256xf32> to vector<1x1x1x256xf32>
    tpu.vector_store %arg5[%c0_13, %c0_14, %c0_15, %c0_16], %28 {strides = array<i32>} : memref<1x1x1x256xf32, #tpu.memory_space<vmem>>, vector<1x1x1x256xf32>,
    return
  }
  func.func @transform_0(%arg0: i32, %arg1: i32, %arg2: i32) -> (i32, i32, i32) {
    %c1_i32 = arith.constant 1 : i32
    %0 = arith.muli %arg1, %c1_i32 : i32
    %1 = arith.addi %0, %arg2 : i32
    %c0_i32 = arith.constant 0 : i32
    %c0_i32_0 = arith.constant 0 : i32
    return %arg0, %c0_i32, %1 : i32, i32, i32
  }
  func.func @transform_1(%arg0: i32, %arg1: i32, %arg2: i32) -> (i32, i32, i32) {
    %c1_i32 = arith.constant 1 : i32
    %0 = arith.muli %arg1, %c1_i32 : i32
    %1 = arith.addi %0, %arg2 : i32
    %c0_i32 = arith.constant 0 : i32
    %c0_i32_0 = arith.constant 0 : i32
    return %arg0, %c0_i32, %1 : i32, i32, i32
  }
  func.func @transform_2(%arg0: i32, %arg1: i32, %arg2: i32) -> (i32, i32, i32, i32) {
    %c0_i32 = arith.constant 0 : i32
    %c0_i32_0 = arith.constant 0 : i32
    %c0_i32_1 = arith.constant 0 : i32
    return %arg0, %arg1, %c0_i32, %c0_i32_0 : i32, i32, i32, i32
  }
}

</mosaic_0001>

<llo_original>
// kernel: cross_entropy_loss.1
$region0: #{cross_entropy_loss.1}
  #allocation0 [shape = 'u32[]', space=smem, size = 0x4, offset = 0x4, fixed_abs, tag = 'smem constant byte address 0x4 - core index']
  #allocation1 [shape = 'u32[144,128]{1,0:T(1,128)}', space=vmem, size = 0x12000, scoped, tag = 'internal scratch']
  %s0 = inlined_call_operand.vmem [shape: f32[2,4,256], index: 0, kind: input, shape index: {}]
  %s1 = inlined_call_operand.vmem [shape: s32[2,1,256], index: 1, kind: input, shape index: {}]
  %s2 = inlined_call_operand.vmem [shape: f32[2,1,1,256], index: 2, kind: output, shape index: {}]
  %s3 = sld [smem:[#allocation0]]
  $region45: #{cross_entropy_loss.1} parent=0
    _
  %s5 = ssub.s32 1, %s3
  %s6 = scalar_select 0, %s5, %s3
  loop: start=0, step=1, limit=4
  $region2: #{cross_entropy_loss.1} parent=0 // loop_pre_header
    _
  $region3: #{cross_entropy_loss.1} parent=0 // loop_header
    %s8 = sphi 0, %s12
    %p9 = scmp.ge.s32.totalorder %s8, 4
    %s15 = sphi 0, %s34
    %s16 = sphi 0, %s30
    %s17 = sphi 0, %s26
    %s18 = sphi 0, %s15
    %s19 = sphi 0, %s16
    %s20 = sphi 0, %s17
    %s21 = sphi 0, %s18
    %s22 = sphi 0, %s19
    %s23 = sphi 0, %s20
    %s41 = sphi 0, %s43
    %s44 = sphi 0, %s41
    %s45 = sphi 0, %s44
    %s61 = sphi 0, %s45
    %s71 = sphi 0, %s73
    %s74 = sphi 0, %s71
    %s75 = sphi 0, %s74
    %s91 = sphi 0, %s75
    %s99 = sphi 0, %s101
    %s102 = sphi 0, %s99
    %s103 = sphi 0, %s102
    %s119 = sphi 0, %s103
  $region4: #{cross_entropy_loss.1} parent=0 // loop_header_branch
    %11 = sbr.rel (%p9) target = $region8
  $region5: #{cross_entropy_loss.1} parent=0 // loop_body
    %s13 = ssub.s32 %s8, 1
    %s14 = ssub.s32 %s8, 2
    %s24 = sadd.s32 1, %s17
    %p25 = scmp.ge.s32.totalorder %s24, 1
    %s26 = scalar_select %p25, 0, %s24
    %s27 = sadd.s32 1, %s16
    %s28 = scalar_select %p25, %s27, %s16
    %p29 = scmp.ge.s32.totalorder %s28, 1
    %s30 = scalar_select %p29, 0, %s28
    %s31 = sadd.s32 1, %s15
    %s32 = scalar_select %p29, %s31, %s15
    %p33 = scmp.ge.s32.totalorder %s32, 2
    %s34 = scalar_select %p33, 0, %s32
    %s35 = sadd.s32 %s16, %s17
    %s36 = sadd.s32 %s30, %s26
    %s37 = ssub.s32 %s15, %s34
    %s38 = ssub.s32 %s35, %s36
    %s39 = sor.u32 %s37, %s38
    %p40 = scmp.eq.s32.totalorder %s39, 0
    %s42 = sadd.s32 %s41, 1
    %s43 = scalar_select %p40, %s41, %s42
    %p46 = pneg %p40
    %p47 = scmp.eq.s32.totalorder %s8, 1
    %p48 = por %p46, %p47
    %p49 = scmp.ne.s32.totalorder %s41, %s44
    %p50 = scmp.eq.s32.totalorder %s8, 0
    %p51 = por %p49, %p50
    %p52 = scmp.ne.s32.totalorder %s41, %s44
    %p53 = scmp.eq.s32.totalorder %s13, 1
    %p54 = por %p52, %p53
    %p55 = scmp.ne.s32.totalorder %s44, %s45
    %p56 = scmp.eq.s32.totalorder %s13, 0
    %p57 = por %p55, %p56
    %p58 = scmp.ne.s32.totalorder %s44, %s45
    %p59 = scmp.eq.s32.totalorder %s14, 1
    %p60 = por %p58, %p59
    %p62 = scmp.ne.s32.totalorder %s45, %s61
    %p63 = scmp.eq.s32.totalorder %s14, 0
    %p64 = por %p62, %p63
    %s65 = sadd.s32 %s16, %s17
    %s66 = sadd.s32 %s30, %s26
    %s67 = ssub.s32 %s15, %s34
    %s68 = ssub.s32 %s65, %s66
    %s69 = sor.u32 %s67, %s68
    %p70 = scmp.eq.s32.totalorder %s69, 0
    %s72 = sadd.s32 %s71, 1
    %s73 = scalar_select %p70, %s71, %s72
    %p76 = pneg %p70
    %p77 = scmp.eq.s32.totalorder %s8, 1
    %p78 = por %p76, %p77
    %p79 = scmp.ne.s32.totalorder %s71, %s74
    %p80 = scmp.eq.s32.totalorder %s8, 0
    %p81 = por %p79, %p80
    %p82 = scmp.ne.s32.totalorder %s71, %s74
    %p83 = scmp.eq.s32.totalorder %s13, 1
    %p84 = por %p82, %p83
    %p85 = scmp.ne.s32.totalorder %s74, %s75
    %p86 = scmp.eq.s32.totalorder %s13, 0
    %p87 = por %p85, %p86
    %p88 = scmp.ne.s32.totalorder %s74, %s75
    %p89 = scmp.eq.s32.totalorder %s14, 1
    %p90 = por %p88, %p89
    %p92 = scmp.ne.s32.totalorder %s75, %s91
    %p93 = scmp.eq.s32.totalorder %s14, 0
    %p94 = por %p92, %p93
    %s95 = ssub.s32 %s15, %s34
    %s96 = ssub.s32 %s16, %s30
    %s97 = sor.u32 %s95, %s96
    %p98 = scmp.eq.s32.totalorder %s97, 0
    %s100 = sadd.s32 %s99, 1
    %s101 = scalar_select %p98, %s99, %s100
    %p104 = pneg %p98
    %p105 = scmp.eq.s32.totalorder %s8, 1
    %p106 = por %p104, %p105
    %p107 = scmp.ne.s32.totalorder %s99, %s102
    %p108 = scmp.eq.s32.totalorder %s8, 0
    %p109 = por %p107, %p108
    %p110 = scmp.ne.s32.totalorder %s99, %s102
    %p111 = scmp.eq.s32.totalorder %s13, 1
    %p112 = por %p110, %p111
    %p113 = scmp.ne.s32.totalorder %s102, %s103
    %p114 = scmp.eq.s32.totalorder %s13, 0
    %p115 = por %p113, %p114
    %p116 = scmp.ne.s32.totalorder %s102, %s103
    %p117 = scmp.eq.s32.totalorder %s14, 1
    %p118 = por %p116, %p117
    %p120 = scmp.ne.s32.totalorder %s103, %s119
    %p121 = scmp.eq.s32.totalorder %s14, 0
    %p122 = por %p120, %p121
    %p123 = scmp.le.s32.totalorder 1, %s8
    %p124 = scmp.lt.s32.totalorder %s8, 3
    %p125 = pnand %p123, %p124
    %p126 = pneg %p125
    // Predicated region
    $region9: #{cross_entropy_loss.1} parent=5 // pred_check
      _
    $region10: #{cross_entropy_loss.1} parent=5 // pred_check_branch
      %128 = sbr.rel (%p125) target = $region12
    $region11: #{cross_entropy_loss.1} parent=5 // pred_region
      %s129 = ssub.s32 %s8, 1
    $region12: #{cross_entropy_loss.1} parent=5 // pred_fallthru
      _
    %p130 = scmp.lt.s32.totalorder %s8, 2
    // Predicated region
    $region13: #{cross_entropy_loss.1} parent=5 // pred_check
      %p131 = pneg %p130
    $region14: #{cross_entropy_loss.1} parent=5 // pred_check_branch
      %133 = sbr.rel (%p131) target = $region16
    $region15: #{cross_entropy_loss.1} parent=5 // pred_region
      // Predicated region
      $region17: #{cross_entropy_loss.1} parent=15 // pred_check
        %p134 = pneg %p51
      $region18: #{cross_entropy_loss.1} parent=15 // pred_check_branch
        %136 = sbr.rel (%p134) target = $region20
      $region19: #{cross_entropy_loss.1} parent=15 // pred_region
        %s137 = sadd.s32 %s16, %s17
        %s138 = smul.u32 2, %s137
        %p139 = scmp.lt.s32.totalorder %s15, 1
        %s140 = scalar_select %p139, %s15, 1
        %p141 = scmp.lt.s32.totalorder %s138, 1
        %s142 = scalar_select %p141, %s138, 1
        %s143 = smul.addr %s140, 2
        %s144 = sadd.s32 %s142, %s143
        %s145 = smul.addr %s144, 4
        %s146 = scalar_lea.vmem %s0, %s145
        %s147 = sadd.s32 %s16, %s17
        %s148 = smul.u32 2, %s147
      $region20: #{cross_entropy_loss.1} parent=15 // pred_fallthru
        _
      // Predicated region
      $region21: #{cross_entropy_loss.1} parent=15 // pred_check
        %p149 = pneg %p81
      $region22: #{cross_entropy_loss.1} parent=15 // pred_check_branch
        %151 = sbr.rel (%p149) target = $region24
      $region23: #{cross_entropy_loss.1} parent=15 // pred_region
        %s152 = sadd.s32 %s16, %s17
        %s153 = smul.u32 2, %s152
        %p154 = scmp.lt.s32.totalorder %s15, 1
        %s155 = scalar_select %p154, %s15, 1
        %p156 = scmp.lt.s32.totalorder %s153, 1
        %s157 = scalar_select %p156, %s153, 1
        %s158 = smul.addr %s155, 2
        %s159 = sadd.s32 %s157, %s158
        %s160 = scalar_lea.vmem %s1, %s159
        %s161 = sadd.s32 %s16, %s17
        %s162 = smul.u32 2, %s161
      $region24: #{cross_entropy_loss.1} parent=15 // pred_fallthru
        _
    $region16: #{cross_entropy_loss.1} parent=5 // pred_fallthru
      _
    %p163 = scmp.le.s32.totalorder 1, %s8
    %p164 = scmp.lt.s32.totalorder %s8, 3
    %p165 = pnand %p163, %p164
    %p166 = pneg %p165
    // Predicated region
    $region25: #{cross_entropy_loss.1} parent=5 // pred_check
      _
    $region26: #{cross_entropy_loss.1} parent=5 // pred_check_branch
      %168 = sbr.rel (%p165) target = $region28
    $region27: #{cross_entropy_loss.1} parent=5 // pred_region
      %s169 = ssub.s32 %s8, 1
      %s170 = sadd.s32 %s19, %s20
      %s171 = smul.u32 2, %s170
      %p172 = scmp.lt.s32.totalorder %s18, 1
      %s173 = scalar_select %p172, %s18, 1
      %p174 = scmp.lt.s32.totalorder %s171, 1
      %s175 = scalar_select %p174, %s171, 1
      %s176 = smul.addr %s173, 2
      %s177 = sadd.s32 %s175, %s176
      %s178 = smul.addr %s177, 4
      %s179 = scalar_lea.vmem %s0, %s178
      %p180 = pneg %p57
      %p181 = pneg %p54
      %s182 = sadd.s32 %s19, %s20
      %s183 = smul.u32 2, %s182
      %p184 = scmp.lt.s32.totalorder %s18, 1
      %s185 = scalar_select %p184, %s18, 1
      %p186 = scmp.lt.s32.totalorder %s183, 1
      %s187 = scalar_select %p186, %s183, 1
      %s188 = smul.addr %s185, 2
      %s189 = sadd.s32 %s187, %s188
      %s190 = scalar_lea.vmem %s1, %s189
      %p191 = pneg %p87
      %p192 = pneg %p84
      %p193 = pneg %p115
      %p194 = pneg %p112
      %p195 = scmp.lt.s32.totalorder %s18, 1
      %s196 = scalar_select %p195, %s18, 1
      %p197 = scmp.lt.s32.totalorder %s19, 0
      %s198 = scalar_select %p197, %s19, 0
      %s199 = smul.addr %s198, 2
      %s200 = smul.addr %s196, 2
      %s201 = sadd.s32 %s199, %s200
      %s202 = scalar_lea.vmem %s2, %s201
      %s203 = sadd.s32 %s19, %s20
      %s204 = smul.u32 2, %s203
      %p205 = scmp.lt.s32.totalorder %s18, 1
      %s206 = scalar_select %p205, %s18, 1
      %p207 = scmp.lt.s32.totalorder %s204, 1
      %s208 = scalar_select %p207, %s204, 1
      %s209 = smul.addr %s206, 2
      %s210 = sadd.s32 %s208, %s209
      %s211 = smul.addr %s210, 4
      %s212 = scalar_lea.vmem %s0, %s211
      %s213 = sadd.s32 %s19, %s20
      %s214 = smul.u32 2, %s213
      %s215 = sadd.s32 %s19, %s20
      %s216 = smul.u32 2, %s215
      %p217 = scmp.lt.s32.totalorder %s18, 1
      %s218 = scalar_select %p217, %s18, 1
      %p219 = scmp.lt.s32.totalorder %s216, 1
      %s220 = scalar_select %p219, %s216, 1
      %s221 = smul.addr %s218, 2
      %s222 = sadd.s32 %s220, %s221
      %s223 = scalar_lea.vmem %s1, %s222
      %s224 = sadd.s32 %s19, %s20
      %s225 = smul.u32 2, %s224
      %p226 = scmp.lt.s32.totalorder %s18, 1
      %s227 = scalar_select %p226, %s18, 1
      %p228 = scmp.lt.s32.totalorder %s19, 0
      %s229 = scalar_select %p228, %s19, 0
      %s230 = smul.addr %s229, 2
      %s231 = smul.addr %s227, 2
      %s232 = sadd.s32 %s230, %s231
      %s233 = scalar_lea.vmem %s2, %s232
      %p234 = scmp.eq.s32.totalorder %s20, 0
      // Predicated region
      $region29: #{cross_entropy_loss.1} parent=27 // pred_check
        %p235 = pneg %p234
      $region30: #{cross_entropy_loss.1} parent=27 // pred_check_branch
        %237 = sbr.rel (%p235) target = $region32
      $region31: #{cross_entropy_loss.1} parent=27 // pred_region
        %v238 = vlaneseq
        %vm239 = vcmp.ge.s32.totalorder %v238, 0
        %vm240 = vcmp.lt.s32.totalorder %v238, 256
        %vm241 = vmand %vm239, %vm240
        %242 = vst.msk [vmem:[%s233] sm:$0x3] %vm241, 0.0
      $region32: #{cross_entropy_loss.1} parent=27 // pred_fallthru
        _
      %v243 = vld [vmem:[%s212] sm:$0xff]
      %v244 = vld [vmem:[%s223] sm:$0x3]
      %v246 = vcombine.high %v243, %v243
      %vm248 = vcmask 1043456
      %v249 = vsel %vm248, %v243, -inf
      %v250 = vrot.slane %v249, 4
      %v251 = vmax.f32 %v249, %v250
      %v252 = vrot.slane %v251, 2
      %v253 = vmax.f32 %v251, %v252
      %v254 = vrot.slane %v253, 1
      %v255 = vmax.f32 %v253, %v254
      %v256 = vsel %vm248, %v246, -inf
      %v257 = vrot.slane %v256, 4
      %v258 = vmax.f32 %v256, %v257
      %v259 = vrot.slane %v258, 2
      %v260 = vmax.f32 %v258, %v259
      %v261 = vrot.slane %v260, 1
      %v262 = vmax.f32 %v260, %v261
      %v265 = vcombine.low %v255, %v262
      %v267 = vsub.f32 %v243, %v265
      %v268 = vmul.f32 %v267, 1.442695
      %v269 = vpow.pop %v268
      %v271 = vcombine.high %v269, %v269
      %v273 = vsel %vm248, %v269, 0.0
      %v274 = vrot.slane %v273, 4
      %v275 = vadd.f32 %v273, %v274
      %v276 = vrot.slane %v275, 2
      %v277 = vadd.f32 %v275, %v276
      %v278 = vrot.slane %v277, 1
      %v279 = vadd.f32 %v277, %v278
      %v280 = vsel %vm248, %v271, 0.0
      %v281 = vrot.slane %v280, 4
      %v282 = vadd.f32 %v280, %v281
      %v283 = vrot.slane %v282, 2
      %v284 = vadd.f32 %v282, %v283
      %v285 = vrot.slane %v284, 1
      %v286 = vadd.f32 %v284, %v285
      %v287 = vlaneseq
      %v288 = vshrl.u32 %v287, 7
      %v289 = vlaneseq
      %v290 = vshrl.u32 %v289, 7
      %v291 = vsub.s32 0, %v290
      %v292 = vrot.slane %v244, %v291
      %v293 = vlaneseq
      %v294 = vshrl.u32 %v293, 7
      %v295 = vsub.s32 1, %v294
      %v296 = vrot.slane %v244, %v295
      %vm297 = vcmp.eq.s32.totalorder %v288, %v292
      %vm298 = vcmp.eq.s32.totalorder %v288, %v296
      %v300 = vcombine.high %v267, %v267
      %v302 = vsel %vm297, %v267, 0.0
      %v303 = vsel %vm298, %v300, 0.0
      %v304 = vsel %vm248, %v302, 0.0
      %v305 = vrot.slane %v304, 4
      %v306 = vadd.f32 %v304, %v305
      %v307 = vrot.slane %v306, 2
      %v308 = vadd.f32 %v306, %v307
      %v309 = vrot.slane %v308, 1
      %v310 = vadd.f32 %v308, %v309
      %v311 = vsel %vm248, %v303, 0.0
      %v312 = vrot.slane %v311, 4
      %v313 = vadd.f32 %v311, %v312
      %v314 = vrot.slane %v313, 2
      %v315 = vadd.f32 %v313, %v314
      %v316 = vrot.slane %v315, 1
      %v317 = vadd.f32 %v315, %v316
      %v318 = vlog2.pop %v279
      %v319 = vmul.f32 %v318, 0.6931472
      %v320 = vlog2.pop %v286
      %v321 = vmul.f32 %v320, 0.6931472
      %v322 = vsub.f32 %v319, %v310
      %v323 = vsub.f32 %v321, %v317
      %v324 = vld [vmem:[%s233] sm:$0x3]
      %v327 = vcombine.low %v322, %v323
      %v329 = vunpack.c.l.s4 1966171168
      %v330 = vunpack.c.0.s8 %v329
      %v331 = vlaneseq
      %v332 = vshrl.u32 %v331, 7
      %v333 = vsub.s32 %v330, %v332
      %v334 = vrot.slane %v327, %v333
      %v336 = vunpack.c.l.s4 1966171168
      %v337 = vunpack.c.0.s8 %v336
      %v338 = vlaneseq
      %v339 = vshrl.u32 %v338, 7
      %v340 = vsub.s32 %v337, %v339
      %v341 = vrot.slane %v334, %v340
      %v343 = vadd.f32 %v324, %v341
      %v344 = vlaneseq
      %vm345 = vcmp.ge.s32.totalorder %v344, 0
      %vm346 = vcmp.lt.s32.totalorder %v344, 256
      %vm347 = vmand %vm345, %vm346
      %348 = vst.msk [vmem:[%s233] sm:$0x3] %vm347, %v343
      %p349 = scmp.lt.s32.totalorder %s18, 1
      %s350 = scalar_select %p349, %s18, 1
      %p351 = scmp.lt.s32.totalorder %s19, 0
      %s352 = scalar_select %p351, %s19, 0
      %s353 = smul.addr %s352, 2
      %s354 = smul.addr %s350, 2
      %s355 = sadd.s32 %s353, %s354
      %s356 = scalar_lea.vmem %s2, %s355
      // Predicated region
      $region33: #{cross_entropy_loss.1} parent=27 // pred_check
        %p357 = pneg %p112
      $region34: #{cross_entropy_loss.1} parent=27 // pred_check_branch
        %359 = sbr.rel (%p357) target = $region36
      $region35: #{cross_entropy_loss.1} parent=27 // pred_region
        _
      $region36: #{cross_entropy_loss.1} parent=27 // pred_fallthru
        _
    $region28: #{cross_entropy_loss.1} parent=5 // pred_fallthru
      _
    %p360 = scmp.le.s32.totalorder 2, %s8
    // Predicated region
    $region37: #{cross_entropy_loss.1} parent=5 // pred_check
      %p361 = pneg %p360
    $region38: #{cross_entropy_loss.1} parent=5 // pred_check_branch
      %363 = sbr.rel (%p361) target = $region40
    $region39: #{cross_entropy_loss.1} parent=5 // pred_region
      %s364 = ssub.s32 %s8, 2
      // Predicated region
      $region41: #{cross_entropy_loss.1} parent=39 // pred_check
        %p365 = pneg %p118
      $region42: #{cross_entropy_loss.1} parent=39 // pred_check_branch
        %367 = sbr.rel (%p365) target = $region44
      $region43: #{cross_entropy_loss.1} parent=39 // pred_region
        %p368 = scmp.lt.s32.totalorder %s21, 1
        %s369 = scalar_select %p368, %s21, 1
        %p370 = scmp.lt.s32.totalorder %s22, 0
        %s371 = scalar_select %p370, %s22, 0
        %s372 = smul.addr %s371, 2
        %s373 = smul.addr %s369, 2
        %s374 = sadd.s32 %s372, %s373
        %s375 = scalar_lea.vmem %s2, %s374
      $region44: #{cross_entropy_loss.1} parent=39 // pred_fallthru
        _
    $region40: #{cross_entropy_loss.1} parent=5 // pred_fallthru
      _
  $region6: #{cross_entropy_loss.1} parent=0 // loop_footer
    %s12 = sadd.s32 1, %s8
  $region7: #{cross_entropy_loss.1} parent=0 // loop_footer_branch
    %7 = sbr.rel target = $region3
  $region8: #{cross_entropy_loss.1} parent=0 // loop_exit
    _

</llo_original>
